<compile_context>
chip_gen: v7x
topology: tpu7x:2x2x1
jax: 0.10.0
libtpu: 0.0.40
codegen_flags: <defaults>
</compile_context>

<pallas_src>
import functools

import jax
import jax.numpy as jnp
from jax.experimental import pallas as pl
from jax.experimental.pallas import tpu as pltpu


# ---------------------------------------------------------------------------
# Kernels
# ---------------------------------------------------------------------------
def _mean_kernel_inplace(seq_ref, out_ref, *, inv_n):
    """Unmasked path, f32 I/O: accumulate straight into the resident out block."""
    k = pl.program_id(2)

    @pl.when(k == 0)
    def _():
        out_ref[...] = jnp.zeros_like(out_ref)

    out_ref[...] += jnp.sum(seq_ref[...], axis=1)          # (tb, tn, tD) -> (tb, tD)

    @pl.when(k == pl.num_programs(2) - 1)
    def _():
        out_ref[...] *= inv_n


def _mean_kernel_acc(seq_ref, out_ref, acc_ref, *, inv_n):
    """Unmasked path, non-f32 I/O: accumulate in an f32 VMEM scratch."""
    k = pl.program_id(2)

    @pl.when(k == 0)
    def _():
        acc_ref[...] = jnp.zeros_like(acc_ref)

    acc_ref[...] += jnp.sum(seq_ref[...].astype(jnp.float32), axis=1)

    @pl.when(k == pl.num_programs(2) - 1)
    def _():
        out_ref[...] = (acc_ref[...] * inv_n).astype(out_ref.dtype)


def _masked_kernel(denom_ref, seq_ref, msk_ref, out_ref, acc_ref):
    """Masked path: weighted sum over nodes, global-scalar normalization."""
    k = pl.program_id(2)

    @pl.when(k == 0)
    def _():
        acc_ref[...] = jnp.zeros_like(acc_ref)

    seq = seq_ref[...].astype(jnp.float32)   # (tb, tn, tD)
    msk = msk_ref[...].astype(jnp.float32)   # (tb, tn, 1) -> lane splat over tD
    acc_ref[...] += jnp.sum(seq * msk, axis=1)

    @pl.when(k == pl.num_programs(2) - 1)
    def _():
        denom = denom_ref[0]                 # global sum(msk), scalar from SMEM
        # Plain divide (not approx reciprocal) to stay bit-close to torch.
        out_ref[...] = (acc_ref[...] / denom).astype(out_ref.dtype)


# ---------------------------------------------------------------------------
# Tile / budget selection
# ---------------------------------------------------------------------------
def _round_up(x, m):
    return ((x + m - 1) // m) * m


def _largest_aligned_divisor(n, align, cap):
    """Largest divisor of n that is a multiple of `align` and <= cap, or None."""
    t = (min(cap, n) // align) * align
    while t >= align:
        if n % t == 0:
            return t
        t -= align
    return None


def _chip_config():
    """Per-generation (per-step seq tile byte target, vmem_limit cap)."""
    try:
        vmem_cap = int(pltpu.get_tpu_info().vmem_capacity_bytes)
    except Exception:
        vmem_cap = 64 << 20                       # conservative (v7x-sized) default
    try:
        kind = jax.devices()[0].device_kind.lower()
    except Exception:
        kind = ""
    # v5e (~0.82 TB/s): 2-4 MiB/step already hides the ~0.35us per-step overhead.
    # v6e/v7x (1.4-3.2 TB/s): want >=8 MiB/step to stay near the HBM roofline.
    target = (4 << 20) if "v5" in kind else (8 << 20)
    # ~75% of physical VMEM, clamped to [32, 96] MiB -> 48 MiB on v7x, 96 on v5e/v6e.
    limit_cap = min(96 << 20, max(32 << 20, (vmem_cap * 3) // 4))
    return target, limit_cap


def _pick_tiles(B, N, D, itemsize, target_bytes):
    # Batch tile (second-to-last dim of the output block): multiple of 8 or full B.
    if B % 8 == 0:
        tb, b_pad = 8, B
    elif B <= 64:
        tb, b_pad = B, B
    else:
        b_pad = _round_up(B, 8)                   # rare ragged large batch: pad+slice
        tb = 8

    # Feature tile (lane axis): multiple of 128 or full D; cap at 2048 lanes so the
    # accumulator + per-step sum stay well inside the 64-vreg file and VMEM.
    if D % 128 == 0 and D > 2048:
        tD = _largest_aligned_divisor(D, 128, 2048) or D
    else:
        tD = D

    # Node/reduction tile (sublane axis): multiple of the packed-row count
    # (8 for f32, 16 for bf16, 32 for int8) or the full N.
    align = max(8, 32 // max(1, itemsize))
    cap_tn = max(align,
                 (target_bytes // max(1, tb * tD * itemsize)) // align * align)
    if N <= cap_tn:
        tn, n_pad = N, N                          # full reduction axis, no padding
    else:
        tn = _largest_aligned_divisor(N, align, cap_tn)
        if tn is None:                            # ragged N: zero-pad instead
            tn = cap_tn
        n_pad = _round_up(N, tn)
    return tb, tn, tD, n_pad, b_pad


def _vmem_limit(need_bytes, cap):
    return int(min(max(need_bytes + (4 << 20), 16 << 20), cap))


# ---------------------------------------------------------------------------
# Wrapper
# ---------------------------------------------------------------------------
def avg_readout(seq, msk=None, *, n_tile=None):
    B, N, D = seq.shape
    dtype = seq.dtype
    itemsize = jnp.dtype(dtype).itemsize
    target_bytes, vmem_cap = _chip_config()

    tb, tn, tD, n_pad, b_pad = _pick_tiles(B, N, D, itemsize, target_bytes)
    if n_tile is not None:                        # test hook: force a reduction tile
        assert n_tile % 8 == 0 or n_tile >= N
        tn = n_tile
        n_pad = _round_up(N, tn)

    pad_b, pad_n = b_pad - B, n_pad - N
    seq_p = seq
    if pad_b or pad_n:
        # Zero padding is exact: padded rows contribute 0 to the sums and the
        # denominators (1/N, sum(msk)) are computed from the true sizes.
        seq_p = jnp.pad(seq, ((0, pad_b), (0, pad_n), (0, 0)))

    d_steps = D // tD
    k_steps = n_pad // tn
    grid = (b_pad // tb, d_steps, k_steps)        # reduction axis last / innermost

    seq_tile_b = tb * tn * tD * itemsize
    out_tile_b = tb * tD * itemsize
    acc_b = tb * tD * 4

    seq_bufs = 2
    seq_kwargs = {}
    if k_steps >= 3 and seq_tile_b < (512 << 10):
        # Tiny per-step transfers (short N): a 3rd in-flight buffer hides DMA
        # issue latency; negligible VMEM cost at these tile sizes.
        seq_bufs = 3
        seq_kwargs["pipeline_mode"] = pl.Buffered(3)
    seq_spec = pl.BlockSpec((tb, tn, tD), lambda b, d, k: (b, k, d), **seq_kwargs)
    out_spec = pl.BlockSpec((tb, tD), lambda b, d, k: (b, d))  # resident accumulator
    out_shape = jax.ShapeDtypeStruct((b_pad, D), dtype)
    semantics = ("parallel", "parallel", "arbitrary")

    if msk is None:
        in_place = dtype == jnp.float32
        kernel = functools.partial(
            _mean_kernel_inplace if in_place else _mean_kernel_acc, inv_n=1.0 / N)
        scratch = [] if in_place else [pltpu.VMEM((tb, tD), jnp.float32)]
        need = seq_bufs * seq_tile_b + 2 * out_tile_b + (0 if in_place else acc_b)
        out = pl.pallas_call(
            kernel,
            out_shape=out_shape,
            grid=grid,
            in_specs=[seq_spec],
            out_specs=out_spec,
            scratch_shapes=scratch,
            compiler_params=pltpu.CompilerParams(
                dimension_semantics=semantics,
                vmem_limit_bytes=_vmem_limit(need, vmem_cap),
            ),
        )(seq_p)
        return out[:B] if pad_b else out

    # --- masked path -------------------------------------------------------
    msk_f32 = msk.astype(jnp.float32)
    denom = jnp.sum(msk_f32).reshape((1,))        # global scalar == torch.sum(msk)
    msk_p = msk_f32
    if pad_b or pad_n:
        msk_p = jnp.pad(msk_f32, ((0, pad_b), (0, pad_n)))
    msk3 = msk_p.reshape(b_pad, n_pad, 1)         # N on sublanes; D broadcast is free

    msk_tile_b = tb * tn * 4
    need = seq_bufs * seq_tile_b + 2 * msk_tile_b + 2 * out_tile_b + acc_b
    out = pl.pallas_call(
        _masked_kernel,
        out_shape=out_shape,
        grid=grid,
        in_specs=[
            pl.BlockSpec(memory_space=pltpu.MemorySpace.SMEM),   # denom (1,) scalar
            seq_spec,
            pl.BlockSpec((tb, tn, 1), lambda b, d, k: (b, k, 0)),  # mask tiles
        ],
        out_specs=out_spec,
        scratch_shapes=[pltpu.VMEM((tb, tD), jnp.float32)],
        compiler_params=pltpu.CompilerParams(
            dimension_semantics=semantics,
            vmem_limit_bytes=_vmem_limit(need, vmem_cap),
        ),
    )(denom, seq_p, msk3)
    return out[:B] if pad_b else out


# ---------------------------------------------------------------------------
# Self-test
# ---------------------------------------------------------------------------
if __name__ == "__main__":
    key = jax.random.PRNGKey(0)
    ks = jax.random.split(key, 8)

    def ref_masked(s, m):
        return jnp.sum(s * m[:, :, None], axis=1) / jnp.sum(m)

    # 1) Module-sized small shapes: batch=2, nodes=8, hidden=32.
    B, N, D = 2, 8, 32
    seq = jax.random.normal(ks[0], (B, N, D), dtype=jnp.float32)
    msk = (jax.random.uniform(ks[1], (B, N)) > 0.3).astype(jnp.float32)
    out_m = jax.block_until_ready(avg_readout(seq, msk))
    assert out_m.shape == (B, D)
    assert jnp.allclose(out_m, ref_masked(seq, msk), atol=1e-5, rtol=1e-5)
    out_u = jax.block_until_ready(avg_readout(seq, None))
    assert out_u.shape == (B, D)
    assert jnp.allclose(out_u, jnp.mean(seq, axis=1), atol=1e-5, rtol=1e-5)

    # 2) Multi-step reduction (tn=8 -> 4 steps; exercises Buffered(3) stream).
    B2, N2, D2 = 2, 32, 128
    seq2 = jax.random.normal(ks[2], (B2, N2, D2), dtype=jnp.float32)
    msk2 = (jax.random.uniform(ks[3], (B2, N2)) > 0.5).astype(jnp.float32)
    out2m = jax.block_until_ready(avg_readout(seq2, msk2, n_tile=8))
    assert jnp.allclose(out2m, ref_masked(seq2, msk2), atol=1e-5, rtol=1e-5)
    out2u = jax.block_until_ready(avg_readout(seq2, None, n_tile=8))
    assert jnp.allclose(out2u, jnp.mean(seq2, axis=1), atol=1e-5, rtol=1e-5)

    # 3) Ragged N (20 -> zero-padded to 24): exercises the padding fallback.
    B3, N3, D3 = 2, 20, 128
    seq3 = jax.random.normal(ks[4], (B3, N3, D3), dtype=jnp.float32)
    msk3 = (jax.random.uniform(ks[5], (B3, N3)) > 0.4).astype(jnp.float32)
    out3m = jax.block_until_ready(avg_readout(seq3, msk3, n_tile=8))
    assert jnp.allclose(out3m, ref_masked(seq3, msk3), atol=1e-5, rtol=1e-5)
    out3u = jax.block_until_ready(avg_readout(seq3, None, n_tile=8))
    assert jnp.allclose(out3u, jnp.mean(seq3, axis=1), atol=1e-5, rtol=1e-5)

    # 4) D-tiled path (D=4096 -> tD=2048, 2 parallel feature tiles).
    B4, N4, D4 = 2, 16, 4096
    seq4 = jax.random.normal(ks[6], (B4, N4, D4), dtype=jnp.float32)
    out4 = jax.block_until_ready(avg_readout(seq4, None, n_tile=8))
    assert jnp.allclose(out4, jnp.mean(seq4, axis=1), atol=1e-5, rtol=1e-5)

    # 5) bf16 input (exercises the f32-scratch accumulation kernel).
    seq5 = jax.random.normal(ks[7], (2, 32, 128), dtype=jnp.float32).astype(jnp.bfloat16)
    out5 = jax.block_until_ready(avg_readout(seq5, None))
    ref5 = jnp.mean(seq5.astype(jnp.float32), axis=1).astype(jnp.bfloat16)
    assert jnp.allclose(out5.astype(jnp.float32), ref5.astype(jnp.float32),
                        atol=2e-2, rtol=2e-2)

    print("KERNEL_OK")
</pallas_src>

<mosaic_0001>
module attributes {stable_mosaic.version = 11 : i64} {
  func.func @_masked_kernel(%arg0: i32, %arg1: i32, %arg2: i32, %arg3: memref<1xf32, #tpu.memory_space<smem>>, %arg4: memref<2x8x32xf32, #tpu.memory_space<vmem>>, %arg5: memref<2x8x1xf32, #tpu.memory_space<vmem>>, %arg6: memref<2x32xf32, #tpu.memory_space<vmem>>, %arg7: memref<2x32xf32, #tpu.memory_space<vmem>>) attributes {dimension_semantics = [#tpu.dimension_semantics<parallel>, #tpu.dimension_semantics<parallel>, #tpu.dimension_semantics<arbitrary>], iteration_bounds = array<i64: 1, 1, 1>, scalar_prefetch = 0 : i64, scratch_operands = 1 : i64, tpu.core_type = #tpu.core_type<tc>, window_params = [{transform_indices = @transform_0, window_bounds = array<i64: 1>}, {transform_indices = @transform_1, window_bounds = array<i64: 2, 8, 32>}, {transform_indices = @transform_2, window_bounds = array<i64: 2, 8, 1>}, {transform_indices = @transform_3, window_bounds = array<i64: 2, 32>}]} {
    %c0_i32 = arith.constant 0 : i32
    %0 = arith.cmpi eq, %arg2, %c0_i32 : i32
    %1 = arith.extui %0 : i1 to i32
    %c0_i32_0 = arith.constant 0 : i32
    %2 = arith.cmpi ne, %1, %c0_i32_0 : i32
    scf.if %2 {
      %cst_12 = arith.constant 0.000000e+00 : f32
      %14 = vector.broadcast %cst_12 : f32 to vector<2x32xf32>
      %c0_13 = arith.constant 0 : index
      %c0_14 = arith.constant 0 : index
      %15 = vector.load %arg7[%c0_13, %c0_14] : memref<2x32xf32, #tpu.memory_space<vmem>>, vector<2x32xf32>
      tpu.vector_store %arg7[%c0_13, %c0_14], %14 {strides = array<i32>} : memref<2x32xf32, #tpu.memory_space<vmem>>, vector<2x32xf32>,
    } else {
    }
    %c0 = arith.constant 0 : index
    %c0_1 = arith.constant 0 : index
    %c0_2 = arith.constant 0 : index
    %3 = vector.load %arg4[%c0, %c0_1, %c0_2] : memref<2x8x32xf32, #tpu.memory_space<vmem>>, vector<2x8x32xf32>
    %c0_3 = arith.constant 0 : index
    %c0_4 = arith.constant 0 : index
    %c0_5 = arith.constant 0 : index
    %4 = vector.load %arg5[%c0_3, %c0_4, %c0_5] : memref<2x8x1xf32, #tpu.memory_space<vmem>>, vector<2x8x1xf32>
    %c0_6 = arith.constant 0 : index
    %c0_7 = arith.constant 0 : index
    %5 = vector.load %arg7[%c0_6, %c0_7] : memref<2x32xf32, #tpu.memory_space<vmem>>, vector<2x32xf32>
    %6 = vector.broadcast %4 : vector<2x8x1xf32> to vector<2x8x32xf32>
    %7 = arith.mulf %3, %6 : vector<2x8x32xf32>
    %cst = arith.constant dense<0.000000e+00> : vector<2x32xf32>
    %8 = vector.multi_reduction <add>, %7, %cst [1] : vector<2x8x32xf32> to vector<2x32xf32>
    %9 = arith.addf %5, %8 : vector<2x32xf32>
    %c0_8 = arith.constant 0 : index
    %c0_9 = arith.constant 0 : index
    %10 = vector.load %arg7[%c0_8, %c0_9] : memref<2x32xf32, #tpu.memory_space<vmem>>, vector<2x32xf32>
    tpu.vector_store %arg7[%c0_8, %c0_9], %9 {strides = array<i32>} : memref<2x32xf32, #tpu.memory_space<vmem>>, vector<2x32xf32>,
    %c0_i32_10 = arith.constant 0 : i32
    %11 = arith.cmpi eq, %arg2, %c0_i32_10 : i32
    %12 = arith.extui %11 : i1 to i32
    %c0_i32_11 = arith.constant 0 : i32
    %13 = arith.cmpi ne, %12, %c0_i32_11 : i32
    scf.if %13 {
      %c0_12 = arith.constant 0 : index
      %14 = memref.load %arg3[%c0_12] : memref<1xf32, #tpu.memory_space<smem>>
      %c0_13 = arith.constant 0 : index
      %c0_14 = arith.constant 0 : index
      %15 = vector.load %arg7[%c0_13, %c0_14] : memref<2x32xf32, #tpu.memory_space<vmem>>, vector<2x32xf32>
      %16 = vector.broadcast %14 : f32 to vector<2x32xf32>
      %17 = arith.divf %15, %16 : vector<2x32xf32>
      %c0_15 = arith.constant 0 : index
      %c0_16 = arith.constant 0 : index
      %18 = vector.load %arg6[%c0_15, %c0_16] : memref<2x32xf32, #tpu.memory_space<vmem>>, vector<2x32xf32>
      tpu.vector_store %arg6[%c0_15, %c0_16], %17 {strides = array<i32>} : memref<2x32xf32, #tpu.memory_space<vmem>>, vector<2x32xf32>,
    } else {
    }
    return
  }
  func.func @transform_0(%arg0: i32, %arg1: i32, %arg2: i32) -> i32 {
    %c0_i32 = arith.constant 0 : i32
    %c0_i32_0 = arith.constant 0 : i32
    return %c0_i32 : i32
  }
  func.func @transform_1(%arg0: i32, %arg1: i32, %arg2: i32) -> (i32, i32, i32) {
    %c0_i32 = arith.constant 0 : i32
    return %arg0, %arg2, %arg1 : i32, i32, i32
  }
  func.func @transform_2(%arg0: i32, %arg1: i32, %arg2: i32) -> (i32, i32, i32) {
    %c0_i32 = arith.constant 0 : i32
    %c0_i32_0 = arith.constant 0 : i32
    return %arg0, %arg2, %c0_i32 : i32, i32, i32
  }
  func.func @transform_3(%arg0: i32, %arg1: i32, %arg2: i32) -> (i32, i32) {
    %c0_i32 = arith.constant 0 : i32
    return %arg0, %arg1 : i32, i32
  }
}

</mosaic_0001>

<llo_original>
// kernel: tpu_custom_call.1
$region0: #{tpu_custom_call.1}
  #allocation0 [shape = 'u32[]', space=smem, size = 0x4, offset = 0x4, fixed_abs, tag = 'smem constant byte address 0x4 - core index']
  #allocation1 [shape = 'u32[144,128]{1,0:T(1,128)}', space=vmem, size = 0x12000, scoped, tag = 'internal scratch']
  #allocation2 [shape = 'f32[2,32]{1,0:T(2,128)}', space=vmem, size = 0x400, scoped, tag = 'scratch operand']
  #allocation3 [shape = 'f32[1]{0:T(128)S(6)}', space=smem, size = 0x200, scoped, tag = 'scoped memory for tpu_custom_call.1']
  %s0 = inlined_call_operand.<no memory space> [shape: f32[1], index: 0, kind: input, shape index: {}]
  %s1 = inlined_call_operand.vmem [shape: f32[2,8,32], index: 1, kind: input, shape index: {}]
  %s2 = inlined_call_operand.vmem [shape: f32[2,8,1], index: 2, kind: input, shape index: {}]
  %s3 = inlined_call_operand.hbm [shape: f32[2,32], index: 3, kind: output, shape index: {}]
  %s4 = sld [smem:[#allocation0]]
  $region30: #{tpu_custom_call.1} parent=0
    _
  %s6 = ssub.s32 1, %s4
  %s7 = scalar_select 0, %s6, %s4
  %8 = sst [smem:[#allocation3]] %s0
  $region1: #{tpu_custom_call.1} parent=0
    #allocation4 [shape = 'u8[1024]{0}', space=vmem, size = 0x400, scoped, tag = 'output window, operand 0, single buffered']
    #allocation5 [shape = 's32[1]{0}', space=sflag, size = 0x4, scoped, tag = 'scoped memory for tpu_custom_call.1']
    %9 = vsyncpa [#allocation5], 0
    // Predicated region
    $region2: #{tpu_custom_call.1} parent=1 // pred_check
      _
    $region3: #{tpu_custom_call.1} parent=1 // pred_check_branch
      %11 = sbr.rel (0) target = $region5
    $region4: #{tpu_custom_call.1} parent=1 // pred_region
      _
    $region5: #{tpu_custom_call.1} parent=1 // pred_fallthru
      _
    // Predicated region
    $region6: #{tpu_custom_call.1} parent=1 // pred_check
      _
    $region7: #{tpu_custom_call.1} parent=1 // pred_check_branch
      %13 = sbr.rel (0) target = $region9
    $region8: #{tpu_custom_call.1} parent=1 // pred_region
      _
    $region9: #{tpu_custom_call.1} parent=1 // pred_fallthru
      _
    // Predicated region
    $region10: #{tpu_custom_call.1} parent=1 // pred_check
      _
    $region11: #{tpu_custom_call.1} parent=1 // pred_check_branch
      %15 = sbr.rel (0) target = $region13
    $region12: #{tpu_custom_call.1} parent=1 // pred_region
      _
    $region13: #{tpu_custom_call.1} parent=1 // pred_fallthru
      _
    %p16 = scmp.eq.s32.totalorder 0, 0
    // Predicated region
    $region14: #{tpu_custom_call.1} parent=1 // pred_check
      %p17 = pneg %p16
    $region15: #{tpu_custom_call.1} parent=1 // pred_check_branch
      %19 = sbr.rel (%p17) target = $region17
    $region16: #{tpu_custom_call.1} parent=1 // pred_region
      %vm20 = vcmask 254976
      %21 = vst.msk [vmem:[#allocation2] sm:$0x3] %vm20, 0.0
    $region17: #{tpu_custom_call.1} parent=1 // pred_fallthru
      _
    %v22 = vld [vmem:[%s1] sm:$0xff]
    %v23 = vld [vmem:[%s1 + $0x8] sm:$0xff]
    %v24 = vld [vmem:[%s2] sm:$0xff]
    %v25 = vld [vmem:[%s2 + $0x8] sm:$0xff]
    %v26 = vld [vmem:[#allocation2] sm:$0x3]
    %28 = vset.pattern.permute.xlu0 0
    %29 = vperm.xlu0 %28, %v24
    %v30 = vpop.permute.xlu0 %29
    %33 = vset.pattern.permute.xlu0 0
    %34 = vperm.xlu0 %33, %v25
    %v35 = vpop.permute.xlu0 %34
    %v37 = vmul.f32 %v22, %v30
    %v38 = vmul.f32 %v23, %v35
    %vm39 = vcmask 261120
    %v40 = vsel %vm39, %v37, 0.0
    %v41 = vrot.slane %v40, 4
    %v42 = vadd.f32 %v40, %v41
    %v43 = vrot.slane %v42, 2
    %v44 = vadd.f32 %v42, %v43
    %v45 = vrot.slane %v44, 1
    %v46 = vadd.f32 %v44, %v45
    %v47 = vsel %vm39, %v38, 0.0
    %v48 = vrot.slane %v47, 4
    %v49 = vadd.f32 %v47, %v48
    %v50 = vrot.slane %v49, 2
    %v51 = vadd.f32 %v49, %v50
    %v52 = vrot.slane %v51, 1
    %v53 = vadd.f32 %v51, %v52
    %vm56 = vcmask 1041409
    %v57 = vsel %vm56, %v53, %v46
    %v59 = vadd.f32 %v26, %v57
    %vm60 = vcmask 254976
    %61 = vst.msk [vmem:[#allocation2] sm:$0x3] %vm60, %v59
    // Predicated region
    $region18: #{tpu_custom_call.1} parent=1 // pred_check
      %p62 = pneg %p16
    $region19: #{tpu_custom_call.1} parent=1 // pred_check_branch
      %64 = sbr.rel (%p62) target = $region21
    $region20: #{tpu_custom_call.1} parent=1 // pred_region
      %s65 = sld [smem:[#allocation3]]
      %v66 = vld [vmem:[#allocation2] sm:$0x3]
      %v67 = vstv %s65
      %v68 = vrcp.pop %v67
      %v69 = vmul.f32 %v66, %v68
      %70 = vst.msk [vmem:[#allocation4] sm:$0x3] %vm60, %v69
    $region21: #{tpu_custom_call.1} parent=1 // pred_fallthru
      _
    // Predicated region
    $region22: #{tpu_custom_call.1} parent=1 // pred_check
      _
    $region23: #{tpu_custom_call.1} parent=1 // pred_check_branch
      %72 = sbr.rel (0) target = $region25
    $region24: #{tpu_custom_call.1} parent=1 // pred_region
      %s74 = ssub.s32 32, 32
      %75 = vsyncadd [#allocation5], %s74
      %s77 = sshll.u32 [#allocation4], 4
      %s78 = int_to_ptr.vmem [resolvable:$true] %s77
      %80 = dma.vmem_to_hbm [thread:$0]  %s78, 32, %s3, [#allocation5]
    $region25: #{tpu_custom_call.1} parent=1 // pred_fallthru
      _
    // Predicated region
    $region26: #{tpu_custom_call.1} parent=1 // pred_check
      _
    $region27: #{tpu_custom_call.1} parent=1 // pred_check_branch
      %82 = sbr.rel (0) target = $region29
    $region28: #{tpu_custom_call.1} parent=1 // pred_region
      %83 = dma.done [#allocation5], 32
    $region29: #{tpu_custom_call.1} parent=1 // pred_fallthru
      _
    %84 = vsyncpa [#allocation5], 1

</llo_original>
